<compile_context>
chip_gen: v6e
topology: v6e:2x2x1
jax: 0.10.0
libtpu: 0.0.40
codegen_flags: <defaults>
</compile_context>

<pallas_src>
import math
import jax
import jax.numpy as jnp
from jax.experimental import pallas as pl
from jax.experimental.pallas import tpu as pltpu


def _round_up(x, m):
    return ((x + m - 1) // m) * m


def highway_fused_kernel(x_ref, w_ref, b_ref, o_ref, h_ref):
    """Grid = (batch_tiles, num_layers).  h_ref: VMEM-resident activation [tb, Dpad]."""
    l = pl.program_id(1)
    n_layers = pl.num_programs(1)
    d = h_ref.shape[1]

    # Load the input activation into the resident scratch on the first layer step.
    @pl.when(l == 0)
    def _():
        h_ref[...] = x_ref[...].astype(jnp.float32)

    x = h_ref[...]                                      # [tb, Dpad]  f32
    w = w_ref[0]                                        # [Dpad, 3*Dpad]  (gate|nonlinear|linear)
    b = b_ref[0]                                        # [1, 3*Dpad]

    # One fused MXU pass for all three affine transforms, bias added once after.
    z = jnp.dot(x, w, preferred_element_type=jnp.float32) + b

    gate = jax.nn.sigmoid(z[:, :d])                     # sigma(G(x))
    nonlinear = jnp.maximum(z[:, d:2 * d], 0.0)         # f = relu
    linear = z[:, 2 * d:]                               # Q(x)

    # gate*nonlinear + (1-gate)*linear, rewritten with one mul + one add fewer.
    h_ref[...] = linear + gate * (nonlinear - linear)

    @pl.when(l == n_layers - 1)
    def _():
        o_ref[...] = h_ref[...].astype(o_ref.dtype)


def pack_highway_params(params, sizes, d_pad):
    """Pack per-layer (wg,bg,wn,bn,wl,bl) into stacked, zero-padded fused tensors.

    Returns:
      w_all: [L, d_pad, 3*d_pad]   columns = [gate | nonlinear | linear]
      b_all: [L, 1, 3*d_pad]
    """
    w_all, b_all = [], []
    for i, (wg, bg, wn, bn, wl, bl) in enumerate(params):
        d_in, d_out = sizes[i], sizes[i + 1]

        def pad_w(w):
            return jnp.pad(w, ((0, d_pad - d_in), (0, d_pad - d_out)))

        def pad_b(b):
            return jnp.pad(b, ((0, 0), (0, d_pad - d_out)))

        w_all.append(jnp.concatenate([pad_w(wg), pad_w(wn), pad_w(wl)], axis=1))
        b_all.append(jnp.concatenate([pad_b(bg), pad_b(bn), pad_b(bl)], axis=1))
    return jnp.stack(w_all), jnp.stack(b_all)


def highway_forward(x, params, sizes):
    """Full Highway forward in ONE pallas_call.  x: [B, sizes[0]] -> [B, sizes[-1]]."""
    B, d_in = x.shape
    L = len(params)
    assert d_in == sizes[0] and L == len(sizes) - 1

    d_pad = _round_up(max(sizes), 128)          # lane-dense features
    w_all, b_all = pack_highway_params(params, sizes, d_pad)

    # Batch tiling: small batches use one tile; large batches use 256-row tiles
    # (batch axis is "parallel" -> megacore sharding on v7x).
    tb = 256
    b_pad = _round_up(B, 8)
    if b_pad <= tb:
        tb = b_pad
    else:
        b_pad = _round_up(B, tb)
    x_p = jnp.pad(x, ((0, b_pad - B), (0, d_pad - d_in)))

    grid = (b_pad // tb, L)
    bytes_per = jnp.dtype(jnp.float32).itemsize
    cost = pl.CostEstimate(
        flops=2 * b_pad * d_pad * 3 * d_pad * L,
        transcendentals=b_pad * d_pad * L,
        bytes_accessed=(x_p.size + w_all.size + b_all.size + b_pad * d_pad) * bytes_per,
    )

    out = pl.pallas_call(
        highway_fused_kernel,
        out_shape=jax.ShapeDtypeStruct((b_pad, d_pad), x.dtype),
        grid_spec=pltpu.PrefetchScalarGridSpec(
            num_scalar_prefetch=0,
            grid=grid,
            in_specs=[
                pl.BlockSpec((tb, d_pad), lambda i, l: (i, 0)),             # x (per batch tile)
                pl.BlockSpec((1, d_pad, 3 * d_pad), lambda i, l: (l, 0, 0)),  # fused weights, layer l
                pl.BlockSpec((1, 1, 3 * d_pad), lambda i, l: (l, 0, 0)),      # fused biases, layer l
            ],
            out_specs=pl.BlockSpec((tb, d_pad), lambda i, l: (i, 0)),
            scratch_shapes=[pltpu.VMEM((tb, d_pad), jnp.float32)],            # resident activation
        ),
        compiler_params=pltpu.CompilerParams(
            dimension_semantics=("parallel", "arbitrary")),
        cost_estimate=cost,
    )(x_p, w_all, b_all)

    return out[:B, :sizes[-1]]


# ----------------------------- init & reference ------------------------------

def init_linear_params(key, d_in, d_out, dtype=jnp.float32):
    """Mimics torch.nn.Linear default init (uniform +/- 1/sqrt(fan_in)); W stored [in,out]."""
    kw, kb = jax.random.split(key)
    bound = 1.0 / math.sqrt(d_in)
    w = jax.random.uniform(kw, (d_in, d_out), dtype, minval=-bound, maxval=bound)
    b = jax.random.uniform(kb, (1, d_out), dtype, minval=-bound, maxval=bound)
    return w, b


def init_highway_params(key, sizes, num_layers):
    params = []
    for i in range(num_layers):
        key, k1, k2, k3 = jax.random.split(key, 4)
        wn, bn = init_linear_params(k1, sizes[i], sizes[i + 1])  # nonlinear
        wl, bl = init_linear_params(k2, sizes[i], sizes[i + 1])  # linear
        wg, bg = init_linear_params(k3, sizes[i], sizes[i + 1])  # gate
        params.append((wg, bg, wn, bn, wl, bl))
    return params


def highway_reference(x, params):
    """Pure-JAX reference for correctness check (matches the PyTorch module)."""
    for (wg, bg, wn, bn, wl, bl) in params:
        gate = jax.nn.sigmoid(x @ wg + bg)
        nonlinear = jnp.maximum(x @ wn + bn, 0.0)
        linear = x @ wl + bl
        x = gate * nonlinear + (1 - gate) * linear
    return x


if __name__ == "__main__":
    key = jax.random.PRNGKey(0)

    # Case 1: standard Highway(sizes=[32,32,32], num_layers=2, f=relu)
    batch, sizes, num_layers = 8, [32, 32, 32], 2
    k_x, k_p, key = jax.random.split(key, 3)
    x = jax.random.normal(k_x, (batch, sizes[0]), jnp.float32)
    params = init_highway_params(k_p, sizes, num_layers)

    out = jax.block_until_ready(highway_forward(x, params, sizes))
    ref = highway_reference(x, params)
    assert out.shape == (batch, sizes[-1])
    assert jnp.allclose(out, ref, atol=1e-5, rtol=1e-5), "mismatch vs reference (case 1)"

    # Case 2: non-square, unaligned sizes + odd batch (exercises zero-padding path)
    batch2, sizes2, num_layers2 = 5, [48, 64, 80], 2
    k_x2, k_p2, key = jax.random.split(key, 3)
    x2 = jax.random.normal(k_x2, (batch2, sizes2[0]), jnp.float32)
    params2 = init_highway_params(k_p2, sizes2, num_layers2)

    out2 = jax.block_until_ready(highway_forward(x2, params2, sizes2))
    ref2 = highway_reference(x2, params2)
    assert out2.shape == (batch2, sizes2[-1])
    assert jnp.allclose(out2, ref2, atol=1e-5, rtol=1e-5), "mismatch vs reference (case 2)"

    print("KERNEL_OK")
</pallas_src>

<mosaic_0001>
module attributes {stable_mosaic.version = 11 : i64} {
  func.func @highway_fused_kernel(%arg0: i32, %arg1: i32, %arg2: memref<8x128xf32, #tpu.memory_space<vmem>>, %arg3: memref<1x128x384xf32, #tpu.memory_space<vmem>>, %arg4: memref<1x1x384xf32, #tpu.memory_space<vmem>>, %arg5: memref<8x128xf32, #tpu.memory_space<vmem>>, %arg6: memref<8x128xf32, #tpu.memory_space<vmem>>) attributes {dimension_semantics = [#tpu.dimension_semantics<parallel>, #tpu.dimension_semantics<arbitrary>], iteration_bounds = array<i64: 1, 2>, scalar_prefetch = 0 : i64, scratch_operands = 1 : i64, tpu.core_type = #tpu.core_type<tc>, window_params = [{transform_indices = @transform_0, window_bounds = array<i64: 8, 128>}, {transform_indices = @transform_1, window_bounds = array<i64: 1, 128, 384>}, {transform_indices = @transform_2, window_bounds = array<i64: 1, 1, 384>}, {transform_indices = @transform_3, window_bounds = array<i64: 8, 128>}]} {
    %c0_i32 = arith.constant 0 : i32
    %0 = arith.cmpi eq, %arg1, %c0_i32 : i32
    %1 = arith.extui %0 : i1 to i32
    %c0_i32_0 = arith.constant 0 : i32
    %2 = arith.cmpi ne, %1, %c0_i32_0 : i32
    scf.if %2 {
      %c0_13 = arith.constant 0 : index
      %c0_14 = arith.constant 0 : index
      %28 = vector.load %arg2[%c0_13, %c0_14] : memref<8x128xf32, #tpu.memory_space<vmem>>, vector<8x128xf32>
      %c0_15 = arith.constant 0 : index
      %c0_16 = arith.constant 0 : index
      %29 = vector.load %arg6[%c0_15, %c0_16] : memref<8x128xf32, #tpu.memory_space<vmem>>, vector<8x128xf32>
      tpu.vector_store %arg6[%c0_15, %c0_16], %28 {strides = array<i32>} : memref<8x128xf32, #tpu.memory_space<vmem>>, vector<8x128xf32>,
    } else {
    }
    %c0 = arith.constant 0 : index
    %c0_1 = arith.constant 0 : index
    %3 = vector.load %arg6[%c0, %c0_1] : memref<8x128xf32, #tpu.memory_space<vmem>>, vector<8x128xf32>
    %c0_2 = arith.constant 0 : index
    %c0_3 = arith.constant 0 : index
    %c0_4 = arith.constant 0 : index
    %4 = vector.load %arg3[%c0_2, %c0_3, %c0_4] : memref<1x128x384xf32, #tpu.memory_space<vmem>>, vector<1x128x384xf32>
    %5 = vector.shape_cast %4 : vector<1x128x384xf32> to vector<128x384xf32>
    %c0_5 = arith.constant 0 : index
    %c0_6 = arith.constant 0 : index
    %c0_7 = arith.constant 0 : index
    %6 = vector.load %arg4[%c0_5, %c0_6, %c0_7] : memref<1x1x384xf32, #tpu.memory_space<vmem>>, vector<1x1x384xf32>
    %7 = vector.shape_cast %6 : vector<1x1x384xf32> to vector<1x384xf32>
    %cst = arith.constant dense<0.000000e+00> : vector<8x384xf32>
    %8 = tpu.matmul %3, %5, %cst {dimension_numbers = #tpu.dot_dimension_numbers<[1], [0], [0], [1], [0, 0, 1, 1], [], []>} : vector<8x128xf32>, vector<128x384xf32>, vector<8x384xf32> -> vector<8x384xf32>
    %9 = vector.broadcast %7 : vector<1x384xf32> to vector<8x384xf32>
    %10 = arith.addf %8, %9 : vector<8x384xf32>
    %11 = vector.extract_strided_slice %10 {offsets = [0, 0], sizes = [8, 128], strides = [1, 1]} : vector<8x384xf32> to vector<8x128xf32>
    %12 = arith.negf %11 : vector<8x128xf32>
    %13 = math.exp %12 : vector<8x128xf32>
    %cst_8 = arith.constant 1.000000e+00 : f32
    %14 = vector.broadcast %cst_8 : f32 to vector<8x128xf32>
    %15 = arith.addf %14, %13 : vector<8x128xf32>
    %16 = arith.divf %14, %15 : vector<8x128xf32>
    %17 = vector.extract_strided_slice %10 {offsets = [0, 128], sizes = [8, 128], strides = [1, 1]} : vector<8x384xf32> to vector<8x128xf32>
    %cst_9 = arith.constant 0.000000e+00 : f32
    %18 = vector.broadcast %cst_9 : f32 to vector<8x128xf32>
    %19 = arith.maximumf %17, %18 : vector<8x128xf32>
    %20 = vector.extract_strided_slice %10 {offsets = [0, 256], sizes = [8, 128], strides = [1, 1]} : vector<8x384xf32> to vector<8x128xf32>
    %21 = arith.subf %19, %20 : vector<8x128xf32>
    %22 = arith.mulf %16, %21 : vector<8x128xf32>
    %23 = arith.addf %20, %22 : vector<8x128xf32>
    %c0_10 = arith.constant 0 : index
    %c0_11 = arith.constant 0 : index
    %24 = vector.load %arg6[%c0_10, %c0_11] : memref<8x128xf32, #tpu.memory_space<vmem>>, vector<8x128xf32>
    tpu.vector_store %arg6[%c0_10, %c0_11], %23 {strides = array<i32>} : memref<8x128xf32, #tpu.memory_space<vmem>>, vector<8x128xf32>,
    %c1_i32 = arith.constant 1 : i32
    %25 = arith.cmpi eq, %arg1, %c1_i32 : i32
    %26 = arith.extui %25 : i1 to i32
    %c0_i32_12 = arith.constant 0 : i32
    %27 = arith.cmpi ne, %26, %c0_i32_12 : i32
    scf.if %27 {
      %c0_13 = arith.constant 0 : index
      %c0_14 = arith.constant 0 : index
      %28 = vector.load %arg6[%c0_13, %c0_14] : memref<8x128xf32, #tpu.memory_space<vmem>>, vector<8x128xf32>
      %c0_15 = arith.constant 0 : index
      %c0_16 = arith.constant 0 : index
      %29 = vector.load %arg5[%c0_15, %c0_16] : memref<8x128xf32, #tpu.memory_space<vmem>>, vector<8x128xf32>
      tpu.vector_store %arg5[%c0_15, %c0_16], %28 {strides = array<i32>} : memref<8x128xf32, #tpu.memory_space<vmem>>, vector<8x128xf32>,
    } else {
    }
    return
  }
  func.func @transform_0(%arg0: i32, %arg1: i32) -> (i32, i32) {
    %c0_i32 = arith.constant 0 : i32
    %c0_i32_0 = arith.constant 0 : i32
    return %arg0, %c0_i32 : i32, i32
  }
  func.func @transform_1(%arg0: i32, %arg1: i32) -> (i32, i32, i32) {
    %c0_i32 = arith.constant 0 : i32
    %c0_i32_0 = arith.constant 0 : i32
    %c0_i32_1 = arith.constant 0 : i32
    return %arg1, %c0_i32, %c0_i32_0 : i32, i32, i32
  }
  func.func @transform_2(%arg0: i32, %arg1: i32) -> (i32, i32, i32) {
    %c0_i32 = arith.constant 0 : i32
    %c0_i32_0 = arith.constant 0 : i32
    %c0_i32_1 = arith.constant 0 : i32
    return %arg1, %c0_i32, %c0_i32_0 : i32, i32, i32
  }
  func.func @transform_3(%arg0: i32, %arg1: i32) -> (i32, i32) {
    %c0_i32 = arith.constant 0 : i32
    %c0_i32_0 = arith.constant 0 : i32
    return %arg0, %c0_i32 : i32, i32
  }
}

</mosaic_0001>

<llo_original>
// kernel: tpu_custom_call.1
$region0: #{tpu_custom_call.1}
  #allocation0 [shape = 'u32[]', space=smem, size = 0x4, offset = 0x4, fixed_abs, tag = 'smem constant byte address 0x4 - core index']
  #allocation1 [shape = 'u32[144,128]{1,0:T(1,128)}', space=vmem, size = 0x12000, scoped, tag = 'internal scratch']
  #allocation2 [shape = 'f32[8,128]{1,0:T(8,128)}', space=vmem, size = 0x1000, scoped, tag = 'scratch operand']
  %s0 = inlined_call_operand.hbm [shape: f32[8,128], index: 0, kind: input, shape index: {}]
  %s1 = inlined_call_operand.hbm [shape: f32[2,128,384], index: 1, kind: input, shape index: {}]
  %s2 = inlined_call_operand.hbm [shape: f32[2,1,384], index: 2, kind: input, shape index: {}]
  %s3 = inlined_call_operand.hbm [shape: f32[8,128], index: 3, kind: output, shape index: {}]
  %s4 = sld [smem:[#allocation0]]
  $region65: #{tpu_custom_call.1} parent=0
    _
  %s6 = ssub.s32 1, %s4
  %s7 = scalar_select 0, %s6, %s4
  $region1: #{tpu_custom_call.1} parent=0
    #allocation3 [shape = 'u8[4096]{0}', space=vmem, size = 0x1000, scoped, tag = 'input window, operand 0, single buffered']
    #allocation4 [shape = 's32[2]{0}', space=sflag, size = 0x8, scoped, tag = 'scoped memory for tpu_custom_call.1']
    #allocation5 [shape = 's32[2]{0}', space=sflag, size = 0x8, scoped, tag = 'scoped memory for tpu_custom_call.1']
    #allocation6 [shape = 'u8[393216]{0}', space=vmem, size = 0x60000, scoped, tag = 'input window, operand 1']
    #allocation7 [shape = 's32[2]{0}', space=sflag, size = 0x8, scoped, tag = 'scoped memory for tpu_custom_call.1']
    #allocation8 [shape = 'u8[3072]{0}', space=vmem, size = 0xc00, scoped, tag = 'input window, operand 2']
    #allocation9 [shape = 'u8[4096]{0}', space=vmem, size = 0x1000, scoped, tag = 'output window, operand 0, single buffered']
    %8 = vsyncpa [#allocation4], 0
    %9 = vsyncpa [#allocation7], 0
    %s10 = scalar_lea.sflag [#allocation7], 1
    %11 = vsyncpa %s10, 0
    %12 = vsyncpa [#allocation5], 0
    loop: start=0, step=1, limit=4
    $region2: #{tpu_custom_call.1} parent=1 // loop_pre_header
      _
    $region3: #{tpu_custom_call.1} parent=1 // loop_header
      %s14 = sphi 0, %s18
      %p15 = scmp.ge.s32.totalorder %s14, 4
      %s21 = sphi 0, %s33
      %s22 = sphi 0, %s29
      %s23 = sphi 0, %s21
      %s24 = sphi 0, %s22
      %s25 = sphi 0, %s23
      %s26 = sphi 0, %s24
      %s36 = sphi 0, %s38
      %s39 = sphi 0, %s36
      %s40 = sphi 0, %s39
      %s56 = sphi 0, %s40
      %s62 = sphi 0, %s64
      %s65 = sphi 0, %s62
      %s66 = sphi 0, %s65
      %s82 = sphi 0, %s66
      %s88 = sphi 0, %s90
      %s91 = sphi 0, %s88
      %s92 = sphi 0, %s91
      %s108 = sphi 0, %s92
      %s114 = sphi 0, %s116
      %s117 = sphi 0, %s114
      %s118 = sphi 0, %s117
      %s134 = sphi 0, %s118
    $region4: #{tpu_custom_call.1} parent=1 // loop_header_branch
      %17 = sbr.rel (%p15) target = $region8
    $region5: #{tpu_custom_call.1} parent=1 // loop_body
      %s19 = ssub.s32 %s14, 1
      %s20 = ssub.s32 %s14, 2
      %s27 = sadd.s32 1, %s22
      %p28 = scmp.ge.s32.totalorder %s27, 2
      %s29 = scalar_select %p28, 0, %s27
      %s30 = sadd.s32 1, %s21
      %s31 = scalar_select %p28, %s30, %s21
      %p32 = scmp.ge.s32.totalorder %s31, 1
      %s33 = scalar_select %p32, 0, %s31
      %s34 = ssub.s32 %s21, %s33
      %p35 = scmp.eq.s32.totalorder %s34, 0
      %s37 = sadd.s32 %s36, 1
      %s38 = scalar_select %p35, %s36, %s37
      %p41 = pneg %p35
      %p42 = scmp.eq.s32.totalorder %s14, 1
      %p43 = por %p41, %p42
      %p44 = scmp.ne.s32.totalorder %s36, %s39
      %p45 = scmp.eq.s32.totalorder %s14, 0
      %p46 = por %p44, %p45
      %p47 = scmp.ne.s32.totalorder %s36, %s39
      %p48 = scmp.eq.s32.totalorder %s19, 1
      %p49 = por %p47, %p48
      %p50 = scmp.ne.s32.totalorder %s39, %s40
      %p51 = scmp.eq.s32.totalorder %s19, 0
      %p52 = por %p50, %p51
      %p53 = scmp.ne.s32.totalorder %s39, %s40
      %p54 = scmp.eq.s32.totalorder %s20, 1
      %p55 = por %p53, %p54
      %p57 = scmp.ne.s32.totalorder %s40, %s56
      %p58 = scmp.eq.s32.totalorder %s20, 0
      %p59 = por %p57, %p58
      %s60 = ssub.s32 %s22, %s29
      %p61 = scmp.eq.s32.totalorder %s60, 0
      %s63 = sadd.s32 %s62, 1
      %s64 = scalar_select %p61, %s62, %s63
      %p67 = pneg %p61
      %p68 = scmp.eq.s32.totalorder %s14, 1
      %p69 = por %p67, %p68
      %p70 = scmp.ne.s32.totalorder %s62, %s65
      %p71 = scmp.eq.s32.totalorder %s14, 0
      %p72 = por %p70, %p71
      %p73 = scmp.ne.s32.totalorder %s62, %s65
      %p74 = scmp.eq.s32.totalorder %s19, 1
      %p75 = por %p73, %p74
      %p76 = scmp.ne.s32.totalorder %s65, %s66
      %p77 = scmp.eq.s32.totalorder %s19, 0
      %p78 = por %p76, %p77
      %p79 = scmp.ne.s32.totalorder %s65, %s66
      %p80 = scmp.eq.s32.totalorder %s20, 1
      %p81 = por %p79, %p80
      %p83 = scmp.ne.s32.totalorder %s66, %s82
      %p84 = scmp.eq.s32.totalorder %s20, 0
      %p85 = por %p83, %p84
      %s86 = ssub.s32 %s22, %s29
      %p87 = scmp.eq.s32.totalorder %s86, 0
      %s89 = sadd.s32 %s88, 1
      %s90 = scalar_select %p87, %s88, %s89
      %p93 = pneg %p87
      %p94 = scmp.eq.s32.totalorder %s14, 1
      %p95 = por %p93, %p94
      %p96 = scmp.ne.s32.totalorder %s88, %s91
      %p97 = scmp.eq.s32.totalorder %s14, 0
      %p98 = por %p96, %p97
      %p99 = scmp.ne.s32.totalorder %s88, %s91
      %p100 = scmp.eq.s32.totalorder %s19, 1
      %p101 = por %p99, %p100
      %p102 = scmp.ne.s32.totalorder %s91, %s92
      %p103 = scmp.eq.s32.totalorder %s19, 0
      %p104 = por %p102, %p103
      %p105 = scmp.ne.s32.totalorder %s91, %s92
      %p106 = scmp.eq.s32.totalorder %s20, 1
      %p107 = por %p105, %p106
      %p109 = scmp.ne.s32.totalorder %s92, %s108
      %p110 = scmp.eq.s32.totalorder %s20, 0
      %p111 = por %p109, %p110
      %s112 = ssub.s32 %s21, %s33
      %p113 = scmp.eq.s32.totalorder %s112, 0
      %s115 = sadd.s32 %s114, 1
      %s116 = scalar_select %p113, %s114, %s115
      %p119 = pneg %p113
      %p120 = scmp.eq.s32.totalorder %s14, 1
      %p121 = por %p119, %p120
      %p122 = scmp.ne.s32.totalorder %s114, %s117
      %p123 = scmp.eq.s32.totalorder %s14, 0
      %p124 = por %p122, %p123
      %p125 = scmp.ne.s32.totalorder %s114, %s117
      %p126 = scmp.eq.s32.totalorder %s19, 1
      %p127 = por %p125, %p126
      %p128 = scmp.ne.s32.totalorder %s117, %s118
      %p129 = scmp.eq.s32.totalorder %s19, 0
      %p130 = por %p128, %p129
      %p131 = scmp.ne.s32.totalorder %s117, %s118
      %p132 = scmp.eq.s32.totalorder %s20, 1
      %p133 = por %p131, %p132
      %p135 = scmp.ne.s32.totalorder %s118, %s134
      %p136 = scmp.eq.s32.totalorder %s20, 0
      %p137 = por %p135, %p136
      %p138 = scmp.le.s32.totalorder 1, %s14
      %p139 = scmp.lt.s32.totalorder %s14, 3
      %p140 = pnand %p138, %p139
      %p141 = pneg %p140
      // Predicated region
      $region9: #{tpu_custom_call.1} parent=5 // pred_check
        _
      $region10: #{tpu_custom_call.1} parent=5 // pred_check_branch
        %143 = sbr.rel (%p140) target = $region12
      $region11: #{tpu_custom_call.1} parent=5 // pred_region
        %s144 = ssub.s32 %s14, 1
        // Predicated region
        $region13: #{tpu_custom_call.1} parent=11 // pred_check
          %p145 = pneg %p52
        $region14: #{tpu_custom_call.1} parent=11 // pred_check_branch
          %147 = sbr.rel (%p145) target = $region16
        $region15: #{tpu_custom_call.1} parent=11 // pred_region
          %s149 = ssub.s32 128, 128
          %150 = vsyncadd [#allocation4], %s149
          %s151 = smul.addr %s23, 128
          %s152 = scalar_lea.hbm %s0, %s151
          %s154 = sshll.u32 [#allocation3], 4
          %s155 = int_to_ptr.vmem [resolvable:$true] %s154
          %157 = dma.hbm_to_vmem [thread:$0]  %s152, 128, %s155, [#allocation4]
        $region16: #{tpu_custom_call.1} parent=11 // pred_fallthru
          _
      $region12: #{tpu_custom_call.1} parent=5 // pred_fallthru
        _
      %p158 = scmp.lt.s32.totalorder %s14, 2
      // Predicated region
      $region17: #{tpu_custom_call.1} parent=5 // pred_check
        %p159 = pneg %p158
      $region18: #{tpu_custom_call.1} parent=5 // pred_check_branch
        %161 = sbr.rel (%p159) target = $region20
      $region19: #{tpu_custom_call.1} parent=5 // pred_region
        // Predicated region
        $region21: #{tpu_custom_call.1} parent=19 // pred_check
          %p162 = pneg %p72
        $region22: #{tpu_custom_call.1} parent=19 // pred_check_branch
          %164 = sbr.rel (%p162) target = $region24
        $region23: #{tpu_custom_call.1} parent=19 // pred_region
          %s165 = sand.u32 %s14, 1
          %s166 = scalar_lea.sflag [#allocation7], %s165
          %s167 = sand.u32 %s62, 1
          %s168 = smul.addr %s167, 384
          %s169 = scalar_lea.vmem [#allocation6], %s168
          %s171 = ssub.s32 6144, 6144
          %172 = vsyncadd %s166, %s171
          %s173 = smul.addr %s22, 48
          %s174 = smul.addr %s173, 128
          %s175 = scalar_lea.hbm %s1, %s174
          %s176 = sshll.u32 %s169, 4
          %s177 = int_to_ptr.vmem [resolvable:$true] %s176
          %182 = dma.hbm_to_vmem [thread:$0]  %s175, 6144, %s177, %s166, 384, 384, 24
        $region24: #{tpu_custom_call.1} parent=19 // pred_fallthru
          _
        // Predicated region
        $region25: #{tpu_custom_call.1} parent=19 // pred_check
          %p183 = pneg %p98
        $region26: #{tpu_custom_call.1} parent=19 // pred_check_branch
          %185 = sbr.rel (%p183) target = $region28
        $region27: #{tpu_custom_call.1} parent=19 // pred_region
          %s186 = sand.u32 %s14, 1
          %s187 = scalar_lea.sflag [#allocation7], %s186
          %s188 = sand.u32 %s88, 1
          %s189 = smul.addr %s188, 3
          %s190 = scalar_lea.vmem [#allocation8], %s189
          %s192 = ssub.s32 48, 48
          %193 = vsyncadd %s187, %s192
          %s194 = smul.addr %s22, 3
          %s195 = smul.addr %s194, 16
          %s196 = scalar_lea.hbm %s2, %s195
          %s198 = sshll.u32 %s190, 4
          %s199 = int_to_ptr.vmem [resolvable:$true] %s198
          %201 = dma.hbm_to_vmem [thread:$0]  %s196, 48, %s199, %s187
        $region28: #{tpu_custom_call.1} parent=19 // pred_fallthru
          _
      $region20: #{tpu_custom_call.1} parent=5 // pred_fallthru
        _
      %p202 = scmp.le.s32.totalorder 1, %s14
      %p203 = scmp.lt.s32.totalorder %s14, 3
      %p204 = pnand %p202, %p203
      %p205 = pneg %p204
      // Predicated region
      $region29: #{tpu_custom_call.1} parent=5 // pred_check
        _
      $region30: #{tpu_custom_call.1} parent=5 // pred_check_branch
        %207 = sbr.rel (%p204) target = $region32
      $region31: #{tpu_custom_call.1} parent=5 // pred_region
        %s208 = ssub.s32 %s14, 1
        // Predicated region
        $region33: #{tpu_custom_call.1} parent=31 // pred_check
          %p209 = pneg %p52
        $region34: #{tpu_custom_call.1} parent=31 // pred_check_branch
          %211 = sbr.rel (%p209) target = $region36
        $region35: #{tpu_custom_call.1} parent=31 // pred_region
          %212 = dma.done [#allocation4], 128
        $region36: #{tpu_custom_call.1} parent=31 // pred_fallthru
          _
        %s213 = sand.u32 %s19, 1
        %s214 = scalar_lea.sflag [#allocation7], %s213
        %s215 = sand.u32 %s65, 1
        %s216 = smul.addr %s215, 384
        %s217 = scalar_lea.vmem [#allocation6], %s216
        // Predicated region
        $region37: #{tpu_custom_call.1} parent=31 // pred_check
          %p218 = pneg %p78
        $region38: #{tpu_custom_call.1} parent=31 // pred_check_branch
          %220 = sbr.rel (%p218) target = $region40
        $region39: #{tpu_custom_call.1} parent=31 // pred_region
          %221 = dma.done %s214, 6144
        $region40: #{tpu_custom_call.1} parent=31 // pred_fallthru
          _
        %s222 = sand.u32 %s19, 1
        %s223 = scalar_lea.sflag [#allocation7], %s222
        %s224 = sand.u32 %s91, 1
        %s225 = smul.addr %s224, 3
        %s226 = scalar_lea.vmem [#allocation8], %s225
        // Predicated region
        $region41: #{tpu_custom_call.1} parent=31 // pred_check
          %p227 = pneg %p104
        $region42: #{tpu_custom_call.1} parent=31 // pred_check_branch
          %229 = sbr.rel (%p227) target = $region44
        $region43: #{tpu_custom_call.1} parent=31 // pred_region
          %230 = dma.done %s223, 48
        $region44: #{tpu_custom_call.1} parent=31 // pred_fallthru
          _
        %p231 = pneg %p52
        %p232 = pneg %p49
        %s233 = sand.u32 %s19, 1
        %s234 = scalar_lea.sflag [#allocation7], %s233
        %s235 = sand.u32 %s65, 1
        %s236 = smul.addr %s235, 384
        %s237 = scalar_lea.vmem [#allocation6], %s236
        %p238 = pneg %p78
        %p239 = pneg %p75
        %s240 = sand.u32 %s19, 1
        %s241 = scalar_lea.sflag [#allocation7], %s240
        %s242 = sand.u32 %s91, 1
        %s243 = smul.addr %s242, 3
        %s244 = scalar_lea.vmem [#allocation8], %s243
        %p245 = pneg %p104
        %p246 = pneg %p101
        %p247 = pneg %p130
        %p248 = pneg %p127
        %p249 = scmp.eq.s32.totalorder %s24, 0
        // Predicated region
        $region45: #{tpu_custom_call.1} parent=31 // pred_check
          %p250 = pneg %p249
        $region46: #{tpu_custom_call.1} parent=31 // pred_check_branch
          %252 = sbr.rel (%p250) target = $region48
        $region47: #{tpu_custom_call.1} parent=31 // pred_region
          %v253 = vld [vmem:[#allocation3] sm:$0xff]
          %254 = vst [vmem:[#allocation2] sm:$0xff] %v253
        $region48: #{tpu_custom_call.1} parent=31 // pred_fallthru
          _
        %v255 = vld [vmem:[#allocation2] sm:$0xff]
        %v256 = vld [vmem:[%s217] sm:$0xff]
        %v257 = vld [vmem:[%s217 + $0x8] sm:$0xff]
        %v258 = vld [vmem:[%s217 + $0x10] sm:$0xff]
        %v259 = vld [vmem:[%s217 + $0x18] sm:$0xff]
        %v260 = vld [vmem:[%s217 + $0x20] sm:$0xff]
        %v261 = vld [vmem:[%s217 + $0x28] sm:$0xff]
        %v262 = vld [vmem:[%s217 + $0x30] sm:$0xff]
        %v263 = vld [vmem:[%s217 + $0x38] sm:$0xff]
        %v264 = vld [vmem:[%s217 + $0x40] sm:$0xff]
        %v265 = vld [vmem:[%s217 + $0x48] sm:$0xff]
        %v266 = vld [vmem:[%s217 + $0x50] sm:$0xff]
        %v267 = vld [vmem:[%s217 + $0x58] sm:$0xff]
        %v268 = vld [vmem:[%s217 + $0x60] sm:$0xff]
        %v269 = vld [vmem:[%s217 + $0x68] sm:$0xff]
        %v270 = vld [vmem:[%s217 + $0x70] sm:$0xff]
        %v271 = vld [vmem:[%s217 + $0x78] sm:$0xff]
        %v272 = vld [vmem:[%s217 + $0x80] sm:$0xff]
        %v273 = vld [vmem:[%s217 + $0x88] sm:$0xff]
        %v274 = vld [vmem:[%s217 + $0x90] sm:$0xff]
        %v275 = vld [vmem:[%s217 + $0x98] sm:$0xff]
        %v276 = vld [vmem:[%s217 + $0xa0] sm:$0xff]
        %v277 = vld [vmem:[%s217 + $0xa8] sm:$0xff]
        %v278 = vld [vmem:[%s217 + $0xb0] sm:$0xff]
        %v279 = vld [vmem:[%s217 + $0xb8] sm:$0xff]
        %v280 = vld [vmem:[%s217 + $0xc0] sm:$0xff]
        %v281 = vld [vmem:[%s217 + $0xc8] sm:$0xff]
        %v282 = vld [vmem:[%s217 + $0xd0] sm:$0xff]
        %v283 = vld [vmem:[%s217 + $0xd8] sm:$0xff]
        %v284 = vld [vmem:[%s217 + $0xe0] sm:$0xff]
        %v285 = vld [vmem:[%s217 + $0xe8] sm:$0xff]
        %v286 = vld [vmem:[%s217 + $0xf0] sm:$0xff]
        %v287 = vld [vmem:[%s217 + $0xf8] sm:$0xff]
        %v288 = vld [vmem:[%s217 + $0x100] sm:$0xff]
        %v289 = vld [vmem:[%s217 + $0x108] sm:$0xff]
        %v290 = vld [vmem:[%s217 + $0x110] sm:$0xff]
        %v291 = vld [vmem:[%s217 + $0x118] sm:$0xff]
        %v292 = vld [vmem:[%s217 + $0x120] sm:$0xff]
        %v293 = vld [vmem:[%s217 + $0x128] sm:$0xff]
        %v294 = vld [vmem:[%s217 + $0x130] sm:$0xff]
        %v295 = vld [vmem:[%s217 + $0x138] sm:$0xff]
        %v296 = vld [vmem:[%s217 + $0x140] sm:$0xff]
        %v297 = vld [vmem:[%s217 + $0x148] sm:$0xff]
        %v298 = vld [vmem:[%s217 + $0x150] sm:$0xff]
        %v299 = vld [vmem:[%s217 + $0x158] sm:$0xff]
        %v300 = vld [vmem:[%s217 + $0x160] sm:$0xff]
        %v301 = vld [vmem:[%s217 + $0x168] sm:$0xff]
        %v302 = vld [vmem:[%s217 + $0x170] sm:$0xff]
        %v303 = vld [vmem:[%s217 + $0x178] sm:$0xff]
        %v304 = vld [vmem:[%s226] sm:$0x7]
        %v306 = vlaneseq
        %v307 = vshrl.u32 %v306, 7
        %v308 = vsub.s32 0, %v307
        %v309 = vrot.slane %v304, %v308
        %v310 = vlaneseq
        %v311 = vshrl.u32 %v310, 7
        %v312 = vsub.s32 1, %v311
        %v313 = vrot.slane %v304, %v312
        %v314 = vlaneseq
        %v315 = vshrl.u32 %v314, 7
        %v316 = vsub.s32 2, %v315
        %v317 = vrot.slane %v304, %v316
        %321 = vmatprep.subr.mxu0 %v302
        %322 = vmatpush1.msra.mxu0 %v301
        %323 = vmatprep.subr.mxu0 %v299
        %324 = vmatpush1.msra.mxu0 %v298
        %325 = vmatprep.subr.mxu0 %v296
        %326 = vmatpush1.msra.mxu0 %v295
        %327 = vmatprep.subr.mxu0 %v293
        %328 = vmatpush1.msra.mxu0 %v292
        %329 = vmatprep.subr.mxu0 %v290
        %330 = vmatpush1.msra.mxu0 %v289
        %331 = vmatprep.subr.mxu0 %v287
        %332 = vmatpush1.msra.mxu0 %v286
        %333 = vmatprep.subr.mxu0 %v284
        %334 = vmatpush1.msra.mxu0 %v283
        %335 = vmatprep.subr.mxu0 %v281
        %336 = vmatpush1.msra.mxu0 %v280
        %337 = vmatprep.subr.mxu0 %v278
        %338 = vmatpush1.msra.mxu0 %v277
        %339 = vmatprep.subr.mxu0 %v275
        %340 = vmatpush1.msra.mxu0 %v274
        %341 = vmatprep.subr.mxu0 %v272
        %342 = vmatpush1.msra.mxu0 %v271
        %343 = vmatprep.subr.mxu0 %v269
        %344 = vmatpush1.msra.mxu0 %v268
        %345 = vmatprep.subr.mxu0 %v266
        %346 = vmatpush1.msra.mxu0 %v265
        %347 = vmatprep.subr.mxu0 %v263
        %348 = vmatpush1.msra.mxu0 %v262
        %349 = vmatprep.subr.mxu0 %v260
        %350 = vmatpush1.msra.mxu0 %v259
        %351 = vmatprep.subr.mxu0 %v257
        %352 = vmatpush1.msra.mxu0 %v256
        %353 = vmatprep.subr.mxu0 0.0
        %354 = vmatpush2.msra.mxu0 0.0
        %355 = vmatprep.subr.mxu0 0.0
        %356 = vmatpush2.msra.mxu0 0.0
        %357 = vmatprep.subr.mxu0 0.0
        %358 = vmatpush2.msra.mxu0 0.0
        %359 = vmatprep.subr.mxu0 0.0
        %360 = vmatpush2.msra.mxu0 0.0
        %361 = vmatprep.subr.mxu0 0.0
        %362 = vmatpush2.msra.mxu0 0.0
        %363 = vmatprep.subr.mxu0 0.0
        %364 = vmatpush2.msra.mxu0 0.0
        %365 = vmatprep.subr.mxu0 0.0
        %366 = vmatpush2.msra.mxu0 0.0
        %367 = vmatprep.subr.mxu0 0.0
        %368 = vmatpush2.msra.mxu0 0.0
        %369 = vmatprep.subr.mxu0 0.0
        %370 = vmatpush2.msra.mxu0 0.0
        %371 = vmatprep.subr.mxu0 0.0
        %372 = vmatpush2.msra.mxu0 0.0
        %373 = vmatprep.subr.mxu0 0.0
        %374 = vmatpush2.msra.mxu0 0.0
        %375 = vmatprep.subr.mxu0 0.0
        %376 = vmatpush2.msra.mxu0 0.0
        %377 = vmatprep.subr.mxu0 0.0
        %378 = vmatpush2.msra.mxu0 0.0
        %379 = vmatprep.subr.mxu0 0.0
        %380 = vmatpush2.msra.mxu0 0.0
        %381 = vmatprep.subr.mxu0 0.0
        %382 = vmatpush2.msra.mxu0 0.0
        %383 = vmatprep.subr.mxu0 0.0
        %384 = vmatpush2.msra.mxu0 0.0
        %385 = vmatprep.mubr.f32.mxu0 0.0
        %386 = vmatmul.mubr.f32.gmra.mxu0 %v255
        %v387 = vpop.f32.mrf.mxu0
        %v388 = vadd.f32 %v309, %v387
        %v389 = vpop.f32.mrf.mxu0
        %v390 = vadd.f32 %v313, %v389
        %391 = vdwg.mxu0
        %392 = vmatprep.subr.mxu0 0.0
        %393 = vmatpush1.msra.mxu0 %v303
        %394 = vmatprep.subr.mxu0 0.0
        %395 = vmatpush1.msra.mxu0 %v300
        %396 = vmatprep.subr.mxu0 0.0
        %397 = vmatpush1.msra.mxu0 %v297
        %398 = vmatprep.subr.mxu0 0.0
        %399 = vmatpush1.msra.mxu0 %v294
        %400 = vmatprep.subr.mxu0 0.0
        %401 = vmatpush1.msra.mxu0 %v291
        %402 = vmatprep.subr.mxu0 0.0
        %403 = vmatpush1.msra.mxu0 %v288
        %404 = vmatprep.subr.mxu0 0.0
        %405 = vmatpush1.msra.mxu0 %v285
        %406 = vmatprep.subr.mxu0 0.0
        %407 = vmatpush1.msra.mxu0 %v282
        %408 = vmatprep.subr.mxu0 0.0
        %409 = vmatpush1.msra.mxu0 %v279
        %410 = vmatprep.subr.mxu0 0.0
        %411 = vmatpush1.msra.mxu0 %v276
        %412 = vmatprep.subr.mxu0 0.0
        %413 = vmatpush1.msra.mxu0 %v273
        %414 = vmatprep.subr.mxu0 0.0
        %415 = vmatpush1.msra.mxu0 %v270
        %416 = vmatprep.subr.mxu0 0.0
        %417 = vmatpush1.msra.mxu0 %v267
        %418 = vmatprep.subr.mxu0 0.0
        %419 = vmatpush1.msra.mxu0 %v264
        %420 = vmatprep.subr.mxu0 0.0
        %421 = vmatpush1.msra.mxu0 %v261
        %422 = vmatprep.subr.mxu0 0.0
        %423 = vmatpush1.msra.mxu0 %v258
        %424 = vmatprep.subr.mxu0 0.0
        %425 = vmatpush2.msra.mxu0 0.0
        %426 = vmatprep.subr.mxu0 0.0
        %427 = vmatpush2.msra.mxu0 0.0
        %428 = vmatprep.subr.mxu0 0.0
        %429 = vmatpush2.msra.mxu0 0.0
        %430 = vmatprep.subr.mxu0 0.0
        %431 = vmatpush2.msra.mxu0 0.0
        %432 = vmatprep.subr.mxu0 0.0
        %433 = vmatpush2.msra.mxu0 0.0
        %434 = vmatprep.subr.mxu0 0.0
        %435 = vmatpush2.msra.mxu0 0.0
        %436 = vmatprep.subr.mxu0 0.0
        %437 = vmatpush2.msra.mxu0 0.0
        %438 = vmatprep.subr.mxu0 0.0
        %439 = vmatpush2.msra.mxu0 0.0
        %440 = vmatprep.subr.mxu0 0.0
        %441 = vmatpush2.msra.mxu0 0.0
        %442 = vmatprep.subr.mxu0 0.0
        %443 = vmatpush2.msra.mxu0 0.0
        %444 = vmatprep.subr.mxu0 0.0
        %445 = vmatpush2.msra.mxu0 0.0
        %446 = vmatprep.subr.mxu0 0.0
        %447 = vmatpush2.msra.mxu0 0.0
        %448 = vmatprep.subr.mxu0 0.0
        %449 = vmatpush2.msra.mxu0 0.0
        %450 = vmatprep.subr.mxu0 0.0
        %451 = vmatpush2.msra.mxu0 0.0
        %452 = vmatprep.subr.mxu0 0.0
        %453 = vmatpush2.msra.mxu0 0.0
        %454 = vmatprep.subr.mxu0 0.0
        %455 = vmatpush2.msra.mxu0 0.0
        %456 = vmatprep.mubr.f32.mxu0 0.0
        %457 = vmatmul.mubr.f32.gmra.mxu0 %v255
        %v458 = vpop.f32.mrf.mxu0
        %v459 = vadd.f32 %v317, %v458
        %v460 = vpop.f32.mrf.mxu0
        %461 = vdwg.mxu0
        %v462 = vxor.u32 %v388, 2147483648
        %v463 = vmul.f32 %v462, 1.442695
        %v464 = vpow.pop %v463
        %v465 = vadd.f32 %v464, 1.0
        %v466 = vrcp.pop %v465
        %v467 = vmul.f32 1.0, %v466
        %v468 = vmax.f32 %v390, 0.0
        %v469 = vsub.f32 %v468, %v459
        %v470 = vmul.f32 %v467, %v469
        %v471 = vadd.f32 %v459, %v470
        %472 = vst [vmem:[#allocation2] sm:$0xff] %v471
        %p473 = scmp.eq.s32.totalorder %s24, 1
        // Predicated region
        $region49: #{tpu_custom_call.1} parent=31 // pred_check
          %p474 = pneg %p473
        $region50: #{tpu_custom_call.1} parent=31 // pred_check_branch
          %476 = sbr.rel (%p474) target = $region52
        $region51: #{tpu_custom_call.1} parent=31 // pred_region
          %v477 = vld [vmem:[#allocation2] sm:$0xff]
          %478 = vst [vmem:[#allocation9] sm:$0xff] %v477
        $region52: #{tpu_custom_call.1} parent=31 // pred_fallthru
          _
        // Predicated region
        $region53: #{tpu_custom_call.1} parent=31 // pred_check
          %p479 = pneg %p127
        $region54: #{tpu_custom_call.1} parent=31 // pred_check_branch
          %481 = sbr.rel (%p479) target = $region56
        $region55: #{tpu_custom_call.1} parent=31 // pred_region
          %s483 = ssub.s32 128, 128
          %484 = vsyncadd [#allocation5], %s483
          %s485 = smul.addr %s23, 128
          %s486 = scalar_lea.hbm %s3, %s485
          %s488 = sshll.u32 [#allocation9], 4
          %s489 = int_to_ptr.vmem [resolvable:$true] %s488
          %491 = dma.vmem_to_hbm [thread:$0]  %s489, 128, %s486, [#allocation5]
        $region56: #{tpu_custom_call.1} parent=31 // pred_fallthru
          _
        // Predicated region
        $region57: #{tpu_custom_call.1} parent=31 // pred_check
          %p492 = pneg %p127
        $region58: #{tpu_custom_call.1} parent=31 // pred_check_branch
          %494 = sbr.rel (%p492) target = $region60
        $region59: #{tpu_custom_call.1} parent=31 // pred_region
          %495 = dma.done [#allocation5], 128
        $region60: #{tpu_custom_call.1} parent=31 // pred_fallthru
          _
      $region32: #{tpu_custom_call.1} parent=5 // pred_fallthru
        _
      %p496 = scmp.le.s32.totalorder 2, %s14
      // Predicated region
      $region61: #{tpu_custom_call.1} parent=5 // pred_check
        %p497 = pneg %p496
      $region62: #{tpu_custom_call.1} parent=5 // pred_check_branch
        %499 = sbr.rel (%p497) target = $region64
      $region63: #{tpu_custom_call.1} parent=5 // pred_region
        %s500 = ssub.s32 %s14, 2
      $region64: #{tpu_custom_call.1} parent=5 // pred_fallthru
        _
    $region6: #{tpu_custom_call.1} parent=1 // loop_footer
      %s18 = sadd.s32 1, %s14
    $region7: #{tpu_custom_call.1} parent=1 // loop_footer_branch
      %13 = sbr.rel target = $region3
    $region8: #{tpu_custom_call.1} parent=1 // loop_exit
      _
    %501 = vsyncpa [#allocation4], 1
    %s502 = scalar_lea.sflag [#allocation4], 1
    %503 = vsyncpa %s502, 1
    %504 = vsyncpa [#allocation7], 1
    %s505 = scalar_lea.sflag [#allocation7], 1
    %506 = vsyncpa %s505, 1
    %507 = vsyncpa [#allocation5], 1
    %s508 = scalar_lea.sflag [#allocation5], 1
    %509 = vsyncpa %s508, 1

</llo_original>
